<compile_context>
chip_gen: v5e
topology: v5e:2x2
jax: 0.10.0
libtpu: 0.0.40
codegen_flags: <defaults>
</compile_context>

<pallas_src>
import numpy as np
import jax
import jax.numpy as jnp
from jax.experimental import pallas as pl
from jax.experimental.pallas import tpu as pltpu


# ----------------------------------------------------------------------------
# Noise schedule (numpy, mirrors make_beta_schedule + set_new_noise_schedule)
# ----------------------------------------------------------------------------
def make_linear_schedule(n_timestep, linear_start=1e-4, linear_end=2e-2):
    betas = np.linspace(linear_start, linear_end, n_timestep, dtype=np.float64)
    alphas = 1.0 - betas
    alphas_cumprod = np.cumprod(alphas, axis=0)
    sqrt_alphas_cumprod_prev = np.sqrt(np.append(1.0, alphas_cumprod))
    return betas, alphas_cumprod, sqrt_alphas_cumprod_prev


# ----------------------------------------------------------------------------
# Fused p_losses kernel (single invocation, no grid):
#   slab rows  [0    : BC )  = up      (x4 nearest-neighbour upsampled inp)
#              [BC   : 2BC)  = x_start (gt)
#              [2BC  : 3BC)  = noise
#   sc (SMEM)  [a(B) | s(B) | a*scaler(B) | Wc(C*C) | Wd2(C*C) | bc(C) | v(C)]
#
#   x_noisy = a*x_start + s*noise                       (q_sample)
#   x_recon = Wc@up + Wd2@x_noisy + bc + v*(a*scaler)   (encoder+denoise stand-in,
#                                                        Wc = Wd1@We, bc = Wd1@be+bd)
#   loss    = sum |noise - x_recon|                     (L1Loss(reduction='sum'))
# ----------------------------------------------------------------------------
def _make_p_losses_kernel(B, C):
    BC = B * C
    A_OFF, S_OFF, ASC_OFF = 0, B, 2 * B
    W1_OFF = 3 * B
    W2_OFF = W1_OFF + C * C
    BIAS_OFF = W2_OFF + C * C
    V_OFF = BIAS_OFF + C

    def kernel(slab_ref, sc_ref, loss_ref):
        abs_acc = None
        for b in range(B):                                  # unrolled over batch rows
            a = sc_ref[A_OFF + b]                           # continuous_sqrt_alpha_cumprod
            s = sc_ref[S_OFF + b]                           # sqrt(max(0, 1 - a^2))
            asc = sc_ref[ASC_OFF + b]                       # a * scaler
            up_g = slab_ref[b * C:(b + 1) * C, :]                       # (C, P)
            x0_g = slab_ref[BC + b * C:BC + (b + 1) * C, :]             # (C, P)
            nz_g = slab_ref[2 * BC + b * C:2 * BC + (b + 1) * C, :]     # (C, P)
            x_noisy = a * x0_g + s * nz_g                   # q_sample, (C, P)
            # channel mixes as unrolled VPU broadcast-FMAs: C=4 is far too small
            # a contraction for the MXU (would pay the push/pop round-trip).
            for o in range(C):
                acc = sc_ref[W1_OFF + o * C] * up_g[0:1, :]
                for k in range(1, C):
                    acc = acc + sc_ref[W1_OFF + o * C + k] * up_g[k:k + 1, :]
                for k in range(C):
                    acc = acc + sc_ref[W2_OFF + o * C + k] * x_noisy[k:k + 1, :]
                acc = acc + (sc_ref[BIAS_OFF + o] + sc_ref[V_OFF + o] * asc)
                d = jnp.abs(nz_g[o:o + 1, :] - acc)
                abs_acc = d if abs_acc is None else abs_acc + d
        # single reduction at the end -> one (1,1) SMEM scalar
        loss_ref[0, 0] = jnp.sum(abs_acc)

    return kernel


# ----------------------------------------------------------------------------
# Jitted wrapper: layout plumbing (one fused XLA op) + one Pallas kernel.
# ----------------------------------------------------------------------------
@jax.jit
def gaussian_diffusion_p_losses(inp, gt, scaler, noise, cont_sqrt_alpha, params):
    B, C, h, w = inp.shape
    _, _, H, W = gt.shape
    P = H * W
    BC = B * C
    We, be, Wd1, Wd2, bd, v = params

    # gen_feat stand-in, spatial part: x4 nearest-neighbour upsample.
    # TODO(synk): replicate low-res inp in-kernel instead of materializing the
    # full-res `up` slab rows; the lane-axis replicate is fragile in Mosaic at
    # these tiny spatial sizes, so it stays fused inside the jitted wrapper.
    up = jnp.repeat(jnp.repeat(inp, H // h, axis=2), W // w, axis=3)      # (B,C,H,W)

    # One stacked image slab, zero-transpose (B*C, P) layout.
    slab = jnp.concatenate([up.reshape(BC, P),
                            gt.reshape(BC, P),
                            noise.reshape(BC, P)], axis=0)                # (3*BC, P)

    # Compose encoder into the first denoise mix (pointwise 1x1 convs):
    #   Wd1 @ (We @ u + be) + bd == (Wd1 @ We) @ u + (Wd1 @ be + bd)
    Wc = Wd1 @ We                # (C, C)
    bc = Wd1 @ be + bd           # (C, 1)

    a = cont_sqrt_alpha
    s = jnp.sqrt(jnp.maximum(0.0, 1.0 - a * a))      # guarded sqrt(1 - a^2)
    sc = jnp.concatenate([a, s, a * scaler,
                          Wc.reshape(-1), Wd2.reshape(-1),
                          bc.reshape(-1), v.reshape(-1)],
                         axis=0).astype(jnp.float32)                      # (3B+2C*C+2C,)

    kernel = _make_p_losses_kernel(B, C)
    loss = pl.pallas_call(
        kernel,
        out_shape=jax.ShapeDtypeStruct((1, 1), jnp.float32),
        in_specs=[pl.BlockSpec(memory_space=pltpu.VMEM),    # (3*BC, P) image slab
                  pl.BlockSpec(memory_space=pltpu.SMEM)],   # flat scalar/weight vector
        out_specs=pl.BlockSpec(memory_space=pltpu.SMEM),    # (1,1) scalar loss
    )(slab, sc)
    # NOTE(scale-up): at real U-Net sizes, add a lane-tiled "parallel" grid axis
    # with per-core partial loss sums (summed outside), keep
    # (num_inputs x 2 buffers x tile bytes) under ~16-24 MiB on v7x (64 MiB
    # physical VMEM, 2 TCs), ~2x larger lane tiles on v5e/v6e (single TC,
    # 128 MiB), and set vmem_limit_bytes explicitly via CompilerParams.
    return loss[0, 0]


# ----------------------------------------------------------------------------
# Pure-JAX reference for verification (mirrors the torch p_losses data flow,
# un-composed encoder -> denoise(cat) -> L1 sum, with the same sqrt guard)
# ----------------------------------------------------------------------------
def ref_p_losses(inp, gt, scaler, noise, cont_sqrt_alpha, params):
    B, C, h, w = inp.shape
    _, _, H, W = gt.shape
    P = H * W
    We, be, Wd1, Wd2, bd, v = params
    up = jnp.repeat(jnp.repeat(inp, H // h, axis=2), W // w, axis=3).reshape(B, C, P)
    gt_f = gt.reshape(B, C, P)
    nz_f = noise.reshape(B, C, P)
    a = cont_sqrt_alpha[:, None, None]
    x_con = jnp.einsum("oc,bcp->bop", We, up) + be[None]
    x_noisy = a * gt_f + jnp.sqrt(jnp.maximum(0.0, 1.0 - a * a)) * nz_f
    x_recon = (jnp.einsum("oc,bcp->bop", Wd1, x_con)
               + jnp.einsum("oc,bcp->bop", Wd2, x_noisy)
               + bd[None]
               + v[None] * (cont_sqrt_alpha * scaler)[:, None, None])
    return jnp.sum(jnp.abs(nz_f - x_recon))


if __name__ == "__main__":
    B, C = 2, 4
    h = w = 4          # low-res input spatial size
    H = W = 16         # gt is 4x upscaled (as in p_sample_loop: i*4 spatial dims)
    n_timestep = 64

    # deterministic synthetic parameters (encoder + denoise_fn 1x1-conv stand-ins)
    def det(shape, scale, shift):
        n = int(np.prod(shape))
        return (jnp.arange(n, dtype=jnp.float32).reshape(shape) / n - shift) * scale

    We = det((C, C), 0.5, 0.5) + 0.5 * jnp.eye(C, dtype=jnp.float32)
    be = det((C, 1), 0.1, 0.5)
    Wd1 = det((C, C), 0.3, 0.4)
    Wd2 = det((C, C), 0.3, 0.6) + 0.3 * jnp.eye(C, dtype=jnp.float32)
    bd = det((C, 1), 0.05, 0.5)
    v = det((C, 1), 0.2, 0.5)
    params = (We, be, Wd1, Wd2, bd, v)

    # noise schedule buffers
    _, _, sqrt_alphas_cumprod_prev = make_linear_schedule(n_timestep)

    # deterministic tensor inputs
    key = jax.random.PRNGKey(0)
    k_inp, k_gt, k_sc, k_nz = jax.random.split(key, 4)
    inp = jax.random.normal(k_inp, (B, C, h, w), dtype=jnp.float32)
    gt = jax.random.normal(k_gt, (B, C, H, W), dtype=jnp.float32)
    scaler = jax.random.uniform(k_sc, (B,), dtype=jnp.float32, minval=1.0, maxval=4.0)
    noise = jax.random.normal(k_nz, (B, C, H, W), dtype=jnp.float32)

    # t ~ randint(1, num_timesteps+1); cont_sqrt_alpha ~ U(prev[t-1], prev[t]).
    # Drawn with seeded numpy (as in the original module's np.random) — no
    # device->host sync in the forward path.
    rng = np.random.default_rng(0)
    t = int(rng.integers(1, n_timestep + 1))
    lo = float(sqrt_alphas_cumprod_prev[t - 1])
    hi = float(sqrt_alphas_cumprod_prev[t])
    cont_sqrt_alpha = jnp.asarray(
        rng.uniform(low=min(lo, hi), high=max(lo, hi), size=B).astype(np.float32))

    loss = gaussian_diffusion_p_losses(inp, gt, scaler, noise, cont_sqrt_alpha, params)
    loss = jax.block_until_ready(loss)

    loss_ref = ref_p_losses(inp, gt, scaler, noise, cont_sqrt_alpha, params)
    np.testing.assert_allclose(np.asarray(loss), np.asarray(loss_ref),
                               rtol=1e-4, atol=1e-3)

    # TODO(synk): real encoder / denoise_fn (U-Net) are external modules; the
    # stand-ins reproduce the data flow (gen_feat -> q_sample -> denoise(cat) -> L1 sum).
    print("KERNEL_OK")
</pallas_src>

<mosaic_0001>
module attributes {stable_mosaic.version = 11 : i64} {
  func.func @kernel(%arg0: memref<24x256xf32, #tpu.memory_space<vmem>>, %arg1: memref<46xf32, #tpu.memory_space<smem>>, %arg2: memref<1x1xf32, #tpu.memory_space<smem>>) attributes {dimension_semantics = [], scalar_prefetch = 0 : i64, scratch_operands = 0 : i64, tpu.core_type = #tpu.core_type<tc>} {
    %c0 = arith.constant 0 : index
    %0 = memref.load %arg1[%c0] : memref<46xf32, #tpu.memory_space<smem>>
    %c2 = arith.constant 2 : index
    %1 = memref.load %arg1[%c2] : memref<46xf32, #tpu.memory_space<smem>>
    %c4 = arith.constant 4 : index
    %2 = memref.load %arg1[%c4] : memref<46xf32, #tpu.memory_space<smem>>
    %c0_0 = arith.constant 0 : index
    %c0_1 = arith.constant 0 : index
    %3 = vector.load %arg0[%c0_0, %c0_1] : memref<24x256xf32, #tpu.memory_space<vmem>>, vector<4x256xf32>
    %c8 = arith.constant 8 : index
    %c0_2 = arith.constant 0 : index
    %4 = vector.load %arg0[%c8, %c0_2] : memref<24x256xf32, #tpu.memory_space<vmem>>, vector<4x256xf32>
    %c16 = arith.constant 16 : index
    %c0_3 = arith.constant 0 : index
    %5 = vector.load %arg0[%c16, %c0_3] : memref<24x256xf32, #tpu.memory_space<vmem>>, vector<4x256xf32>
    %6 = vector.broadcast %0 : f32 to vector<4x256xf32>
    %7 = arith.mulf %6, %4 : vector<4x256xf32>
    %8 = vector.broadcast %1 : f32 to vector<4x256xf32>
    %9 = arith.mulf %8, %5 : vector<4x256xf32>
    %10 = arith.addf %7, %9 : vector<4x256xf32>
    %c6 = arith.constant 6 : index
    %11 = memref.load %arg1[%c6] : memref<46xf32, #tpu.memory_space<smem>>
    %12 = vector.extract_strided_slice %3 {offsets = [0, 0], sizes = [1, 256], strides = [1, 1]} : vector<4x256xf32> to vector<1x256xf32>
    %13 = vector.broadcast %11 : f32 to vector<1x256xf32>
    %14 = arith.mulf %13, %12 : vector<1x256xf32>
    %c7 = arith.constant 7 : index
    %15 = memref.load %arg1[%c7] : memref<46xf32, #tpu.memory_space<smem>>
    %16 = vector.extract_strided_slice %3 {offsets = [1, 0], sizes = [1, 256], strides = [1, 1]} : vector<4x256xf32> to vector<1x256xf32>
    %17 = vector.broadcast %15 : f32 to vector<1x256xf32>
    %18 = arith.mulf %17, %16 : vector<1x256xf32>
    %19 = arith.addf %14, %18 : vector<1x256xf32>
    %c8_4 = arith.constant 8 : index
    %20 = memref.load %arg1[%c8_4] : memref<46xf32, #tpu.memory_space<smem>>
    %21 = vector.extract_strided_slice %3 {offsets = [2, 0], sizes = [1, 256], strides = [1, 1]} : vector<4x256xf32> to vector<1x256xf32>
    %22 = vector.broadcast %20 : f32 to vector<1x256xf32>
    %23 = arith.mulf %22, %21 : vector<1x256xf32>
    %24 = arith.addf %19, %23 : vector<1x256xf32>
    %c9 = arith.constant 9 : index
    %25 = memref.load %arg1[%c9] : memref<46xf32, #tpu.memory_space<smem>>
    %26 = vector.extract_strided_slice %3 {offsets = [3, 0], sizes = [1, 256], strides = [1, 1]} : vector<4x256xf32> to vector<1x256xf32>
    %27 = vector.broadcast %25 : f32 to vector<1x256xf32>
    %28 = arith.mulf %27, %26 : vector<1x256xf32>
    %29 = arith.addf %24, %28 : vector<1x256xf32>
    %c22 = arith.constant 22 : index
    %30 = memref.load %arg1[%c22] : memref<46xf32, #tpu.memory_space<smem>>
    %31 = vector.extract_strided_slice %10 {offsets = [0, 0], sizes = [1, 256], strides = [1, 1]} : vector<4x256xf32> to vector<1x256xf32>
    %32 = vector.broadcast %30 : f32 to vector<1x256xf32>
    %33 = arith.mulf %32, %31 : vector<1x256xf32>
    %34 = arith.addf %29, %33 : vector<1x256xf32>
    %c23 = arith.constant 23 : index
    %35 = memref.load %arg1[%c23] : memref<46xf32, #tpu.memory_space<smem>>
    %36 = vector.extract_strided_slice %10 {offsets = [1, 0], sizes = [1, 256], strides = [1, 1]} : vector<4x256xf32> to vector<1x256xf32>
    %37 = vector.broadcast %35 : f32 to vector<1x256xf32>
    %38 = arith.mulf %37, %36 : vector<1x256xf32>
    %39 = arith.addf %34, %38 : vector<1x256xf32>
    %c24 = arith.constant 24 : index
    %40 = memref.load %arg1[%c24] : memref<46xf32, #tpu.memory_space<smem>>
    %41 = vector.extract_strided_slice %10 {offsets = [2, 0], sizes = [1, 256], strides = [1, 1]} : vector<4x256xf32> to vector<1x256xf32>
    %42 = vector.broadcast %40 : f32 to vector<1x256xf32>
    %43 = arith.mulf %42, %41 : vector<1x256xf32>
    %44 = arith.addf %39, %43 : vector<1x256xf32>
    %c25 = arith.constant 25 : index
    %45 = memref.load %arg1[%c25] : memref<46xf32, #tpu.memory_space<smem>>
    %46 = vector.extract_strided_slice %10 {offsets = [3, 0], sizes = [1, 256], strides = [1, 1]} : vector<4x256xf32> to vector<1x256xf32>
    %47 = vector.broadcast %45 : f32 to vector<1x256xf32>
    %48 = arith.mulf %47, %46 : vector<1x256xf32>
    %49 = arith.addf %44, %48 : vector<1x256xf32>
    %c38 = arith.constant 38 : index
    %50 = memref.load %arg1[%c38] : memref<46xf32, #tpu.memory_space<smem>>
    %c42 = arith.constant 42 : index
    %51 = memref.load %arg1[%c42] : memref<46xf32, #tpu.memory_space<smem>>
    %52 = arith.mulf %51, %2 : f32
    %53 = arith.addf %50, %52 : f32
    %54 = vector.broadcast %53 : f32 to vector<1x256xf32>
    %55 = arith.addf %49, %54 : vector<1x256xf32>
    %56 = vector.extract_strided_slice %5 {offsets = [0, 0], sizes = [1, 256], strides = [1, 1]} : vector<4x256xf32> to vector<1x256xf32>
    %57 = arith.subf %56, %55 : vector<1x256xf32>
    %58 = math.absf %57 : vector<1x256xf32>
    %c10 = arith.constant 10 : index
    %59 = memref.load %arg1[%c10] : memref<46xf32, #tpu.memory_space<smem>>
    %60 = vector.extract_strided_slice %3 {offsets = [0, 0], sizes = [1, 256], strides = [1, 1]} : vector<4x256xf32> to vector<1x256xf32>
    %61 = vector.broadcast %59 : f32 to vector<1x256xf32>
    %62 = arith.mulf %61, %60 : vector<1x256xf32>
    %c11 = arith.constant 11 : index
    %63 = memref.load %arg1[%c11] : memref<46xf32, #tpu.memory_space<smem>>
    %64 = vector.extract_strided_slice %3 {offsets = [1, 0], sizes = [1, 256], strides = [1, 1]} : vector<4x256xf32> to vector<1x256xf32>
    %65 = vector.broadcast %63 : f32 to vector<1x256xf32>
    %66 = arith.mulf %65, %64 : vector<1x256xf32>
    %67 = arith.addf %62, %66 : vector<1x256xf32>
    %c12 = arith.constant 12 : index
    %68 = memref.load %arg1[%c12] : memref<46xf32, #tpu.memory_space<smem>>
    %69 = vector.extract_strided_slice %3 {offsets = [2, 0], sizes = [1, 256], strides = [1, 1]} : vector<4x256xf32> to vector<1x256xf32>
    %70 = vector.broadcast %68 : f32 to vector<1x256xf32>
    %71 = arith.mulf %70, %69 : vector<1x256xf32>
    %72 = arith.addf %67, %71 : vector<1x256xf32>
    %c13 = arith.constant 13 : index
    %73 = memref.load %arg1[%c13] : memref<46xf32, #tpu.memory_space<smem>>
    %74 = vector.extract_strided_slice %3 {offsets = [3, 0], sizes = [1, 256], strides = [1, 1]} : vector<4x256xf32> to vector<1x256xf32>
    %75 = vector.broadcast %73 : f32 to vector<1x256xf32>
    %76 = arith.mulf %75, %74 : vector<1x256xf32>
    %77 = arith.addf %72, %76 : vector<1x256xf32>
    %c26 = arith.constant 26 : index
    %78 = memref.load %arg1[%c26] : memref<46xf32, #tpu.memory_space<smem>>
    %79 = vector.extract_strided_slice %10 {offsets = [0, 0], sizes = [1, 256], strides = [1, 1]} : vector<4x256xf32> to vector<1x256xf32>
    %80 = vector.broadcast %78 : f32 to vector<1x256xf32>
    %81 = arith.mulf %80, %79 : vector<1x256xf32>
    %82 = arith.addf %77, %81 : vector<1x256xf32>
    %c27 = arith.constant 27 : index
    %83 = memref.load %arg1[%c27] : memref<46xf32, #tpu.memory_space<smem>>
    %84 = vector.extract_strided_slice %10 {offsets = [1, 0], sizes = [1, 256], strides = [1, 1]} : vector<4x256xf32> to vector<1x256xf32>
    %85 = vector.broadcast %83 : f32 to vector<1x256xf32>
    %86 = arith.mulf %85, %84 : vector<1x256xf32>
    %87 = arith.addf %82, %86 : vector<1x256xf32>
    %c28 = arith.constant 28 : index
    %88 = memref.load %arg1[%c28] : memref<46xf32, #tpu.memory_space<smem>>
    %89 = vector.extract_strided_slice %10 {offsets = [2, 0], sizes = [1, 256], strides = [1, 1]} : vector<4x256xf32> to vector<1x256xf32>
    %90 = vector.broadcast %88 : f32 to vector<1x256xf32>
    %91 = arith.mulf %90, %89 : vector<1x256xf32>
    %92 = arith.addf %87, %91 : vector<1x256xf32>
    %c29 = arith.constant 29 : index
    %93 = memref.load %arg1[%c29] : memref<46xf32, #tpu.memory_space<smem>>
    %94 = vector.extract_strided_slice %10 {offsets = [3, 0], sizes = [1, 256], strides = [1, 1]} : vector<4x256xf32> to vector<1x256xf32>
    %95 = vector.broadcast %93 : f32 to vector<1x256xf32>
    %96 = arith.mulf %95, %94 : vector<1x256xf32>
    %97 = arith.addf %92, %96 : vector<1x256xf32>
    %c39 = arith.constant 39 : index
    %98 = memref.load %arg1[%c39] : memref<46xf32, #tpu.memory_space<smem>>
    %c43 = arith.constant 43 : index
    %99 = memref.load %arg1[%c43] : memref<46xf32, #tpu.memory_space<smem>>
    %100 = arith.mulf %99, %2 : f32
    %101 = arith.addf %98, %100 : f32
    %102 = vector.broadcast %101 : f32 to vector<1x256xf32>
    %103 = arith.addf %97, %102 : vector<1x256xf32>
    %104 = vector.extract_strided_slice %5 {offsets = [1, 0], sizes = [1, 256], strides = [1, 1]} : vector<4x256xf32> to vector<1x256xf32>
    %105 = arith.subf %104, %103 : vector<1x256xf32>
    %106 = math.absf %105 : vector<1x256xf32>
    %107 = arith.addf %58, %106 : vector<1x256xf32>
    %c14 = arith.constant 14 : index
    %108 = memref.load %arg1[%c14] : memref<46xf32, #tpu.memory_space<smem>>
    %109 = vector.extract_strided_slice %3 {offsets = [0, 0], sizes = [1, 256], strides = [1, 1]} : vector<4x256xf32> to vector<1x256xf32>
    %110 = vector.broadcast %108 : f32 to vector<1x256xf32>
    %111 = arith.mulf %110, %109 : vector<1x256xf32>
    %c15 = arith.constant 15 : index
    %112 = memref.load %arg1[%c15] : memref<46xf32, #tpu.memory_space<smem>>
    %113 = vector.extract_strided_slice %3 {offsets = [1, 0], sizes = [1, 256], strides = [1, 1]} : vector<4x256xf32> to vector<1x256xf32>
    %114 = vector.broadcast %112 : f32 to vector<1x256xf32>
    %115 = arith.mulf %114, %113 : vector<1x256xf32>
    %116 = arith.addf %111, %115 : vector<1x256xf32>
    %c16_5 = arith.constant 16 : index
    %117 = memref.load %arg1[%c16_5] : memref<46xf32, #tpu.memory_space<smem>>
    %118 = vector.extract_strided_slice %3 {offsets = [2, 0], sizes = [1, 256], strides = [1, 1]} : vector<4x256xf32> to vector<1x256xf32>
    %119 = vector.broadcast %117 : f32 to vector<1x256xf32>
    %120 = arith.mulf %119, %118 : vector<1x256xf32>
    %121 = arith.addf %116, %120 : vector<1x256xf32>
    %c17 = arith.constant 17 : index
    %122 = memref.load %arg1[%c17] : memref<46xf32, #tpu.memory_space<smem>>
    %123 = vector.extract_strided_slice %3 {offsets = [3, 0], sizes = [1, 256], strides = [1, 1]} : vector<4x256xf32> to vector<1x256xf32>
    %124 = vector.broadcast %122 : f32 to vector<1x256xf32>
    %125 = arith.mulf %124, %123 : vector<1x256xf32>
    %126 = arith.addf %121, %125 : vector<1x256xf32>
    %c30 = arith.constant 30 : index
    %127 = memref.load %arg1[%c30] : memref<46xf32, #tpu.memory_space<smem>>
    %128 = vector.extract_strided_slice %10 {offsets = [0, 0], sizes = [1, 256], strides = [1, 1]} : vector<4x256xf32> to vector<1x256xf32>
    %129 = vector.broadcast %127 : f32 to vector<1x256xf32>
    %130 = arith.mulf %129, %128 : vector<1x256xf32>
    %131 = arith.addf %126, %130 : vector<1x256xf32>
    %c31 = arith.constant 31 : index
    %132 = memref.load %arg1[%c31] : memref<46xf32, #tpu.memory_space<smem>>
    %133 = vector.extract_strided_slice %10 {offsets = [1, 0], sizes = [1, 256], strides = [1, 1]} : vector<4x256xf32> to vector<1x256xf32>
    %134 = vector.broadcast %132 : f32 to vector<1x256xf32>
    %135 = arith.mulf %134, %133 : vector<1x256xf32>
    %136 = arith.addf %131, %135 : vector<1x256xf32>
    %c32 = arith.constant 32 : index
    %137 = memref.load %arg1[%c32] : memref<46xf32, #tpu.memory_space<smem>>
    %138 = vector.extract_strided_slice %10 {offsets = [2, 0], sizes = [1, 256], strides = [1, 1]} : vector<4x256xf32> to vector<1x256xf32>
    %139 = vector.broadcast %137 : f32 to vector<1x256xf32>
    %140 = arith.mulf %139, %138 : vector<1x256xf32>
    %141 = arith.addf %136, %140 : vector<1x256xf32>
    %c33 = arith.constant 33 : index
    %142 = memref.load %arg1[%c33] : memref<46xf32, #tpu.memory_space<smem>>
    %143 = vector.extract_strided_slice %10 {offsets = [3, 0], sizes = [1, 256], strides = [1, 1]} : vector<4x256xf32> to vector<1x256xf32>
    %144 = vector.broadcast %142 : f32 to vector<1x256xf32>
    %145 = arith.mulf %144, %143 : vector<1x256xf32>
    %146 = arith.addf %141, %145 : vector<1x256xf32>
    %c40 = arith.constant 40 : index
    %147 = memref.load %arg1[%c40] : memref<46xf32, #tpu.memory_space<smem>>
    %c44 = arith.constant 44 : index
    %148 = memref.load %arg1[%c44] : memref<46xf32, #tpu.memory_space<smem>>
    %149 = arith.mulf %148, %2 : f32
    %150 = arith.addf %147, %149 : f32
    %151 = vector.broadcast %150 : f32 to vector<1x256xf32>
    %152 = arith.addf %146, %151 : vector<1x256xf32>
    %153 = vector.extract_strided_slice %5 {offsets = [2, 0], sizes = [1, 256], strides = [1, 1]} : vector<4x256xf32> to vector<1x256xf32>
    %154 = arith.subf %153, %152 : vector<1x256xf32>
    %155 = math.absf %154 : vector<1x256xf32>
    %156 = arith.addf %107, %155 : vector<1x256xf32>
    %c18 = arith.constant 18 : index
    %157 = memref.load %arg1[%c18] : memref<46xf32, #tpu.memory_space<smem>>
    %158 = vector.extract_strided_slice %3 {offsets = [0, 0], sizes = [1, 256], strides = [1, 1]} : vector<4x256xf32> to vector<1x256xf32>
    %159 = vector.broadcast %157 : f32 to vector<1x256xf32>
    %160 = arith.mulf %159, %158 : vector<1x256xf32>
    %c19 = arith.constant 19 : index
    %161 = memref.load %arg1[%c19] : memref<46xf32, #tpu.memory_space<smem>>
    %162 = vector.extract_strided_slice %3 {offsets = [1, 0], sizes = [1, 256], strides = [1, 1]} : vector<4x256xf32> to vector<1x256xf32>
    %163 = vector.broadcast %161 : f32 to vector<1x256xf32>
    %164 = arith.mulf %163, %162 : vector<1x256xf32>
    %165 = arith.addf %160, %164 : vector<1x256xf32>
    %c20 = arith.constant 20 : index
    %166 = memref.load %arg1[%c20] : memref<46xf32, #tpu.memory_space<smem>>
    %167 = vector.extract_strided_slice %3 {offsets = [2, 0], sizes = [1, 256], strides = [1, 1]} : vector<4x256xf32> to vector<1x256xf32>
    %168 = vector.broadcast %166 : f32 to vector<1x256xf32>
    %169 = arith.mulf %168, %167 : vector<1x256xf32>
    %170 = arith.addf %165, %169 : vector<1x256xf32>
    %c21 = arith.constant 21 : index
    %171 = memref.load %arg1[%c21] : memref<46xf32, #tpu.memory_space<smem>>
    %172 = vector.extract_strided_slice %3 {offsets = [3, 0], sizes = [1, 256], strides = [1, 1]} : vector<4x256xf32> to vector<1x256xf32>
    %173 = vector.broadcast %171 : f32 to vector<1x256xf32>
    %174 = arith.mulf %173, %172 : vector<1x256xf32>
    %175 = arith.addf %170, %174 : vector<1x256xf32>
    %c34 = arith.constant 34 : index
    %176 = memref.load %arg1[%c34] : memref<46xf32, #tpu.memory_space<smem>>
    %177 = vector.extract_strided_slice %10 {offsets = [0, 0], sizes = [1, 256], strides = [1, 1]} : vector<4x256xf32> to vector<1x256xf32>
    %178 = vector.broadcast %176 : f32 to vector<1x256xf32>
    %179 = arith.mulf %178, %177 : vector<1x256xf32>
    %180 = arith.addf %175, %179 : vector<1x256xf32>
    %c35 = arith.constant 35 : index
    %181 = memref.load %arg1[%c35] : memref<46xf32, #tpu.memory_space<smem>>
    %182 = vector.extract_strided_slice %10 {offsets = [1, 0], sizes = [1, 256], strides = [1, 1]} : vector<4x256xf32> to vector<1x256xf32>
    %183 = vector.broadcast %181 : f32 to vector<1x256xf32>
    %184 = arith.mulf %183, %182 : vector<1x256xf32>
    %185 = arith.addf %180, %184 : vector<1x256xf32>
    %c36 = arith.constant 36 : index
    %186 = memref.load %arg1[%c36] : memref<46xf32, #tpu.memory_space<smem>>
    %187 = vector.extract_strided_slice %10 {offsets = [2, 0], sizes = [1, 256], strides = [1, 1]} : vector<4x256xf32> to vector<1x256xf32>
    %188 = vector.broadcast %186 : f32 to vector<1x256xf32>
    %189 = arith.mulf %188, %187 : vector<1x256xf32>
    %190 = arith.addf %185, %189 : vector<1x256xf32>
    %c37 = arith.constant 37 : index
    %191 = memref.load %arg1[%c37] : memref<46xf32, #tpu.memory_space<smem>>
    %192 = vector.extract_strided_slice %10 {offsets = [3, 0], sizes = [1, 256], strides = [1, 1]} : vector<4x256xf32> to vector<1x256xf32>
    %193 = vector.broadcast %191 : f32 to vector<1x256xf32>
    %194 = arith.mulf %193, %192 : vector<1x256xf32>
    %195 = arith.addf %190, %194 : vector<1x256xf32>
    %c41 = arith.constant 41 : index
    %196 = memref.load %arg1[%c41] : memref<46xf32, #tpu.memory_space<smem>>
    %c45 = arith.constant 45 : index
    %197 = memref.load %arg1[%c45] : memref<46xf32, #tpu.memory_space<smem>>
    %198 = arith.mulf %197, %2 : f32
    %199 = arith.addf %196, %198 : f32
    %200 = vector.broadcast %199 : f32 to vector<1x256xf32>
    %201 = arith.addf %195, %200 : vector<1x256xf32>
    %202 = vector.extract_strided_slice %5 {offsets = [3, 0], sizes = [1, 256], strides = [1, 1]} : vector<4x256xf32> to vector<1x256xf32>
    %203 = arith.subf %202, %201 : vector<1x256xf32>
    %204 = math.absf %203 : vector<1x256xf32>
    %205 = arith.addf %156, %204 : vector<1x256xf32>
    %c1 = arith.constant 1 : index
    %206 = memref.load %arg1[%c1] : memref<46xf32, #tpu.memory_space<smem>>
    %c3 = arith.constant 3 : index
    %207 = memref.load %arg1[%c3] : memref<46xf32, #tpu.memory_space<smem>>
    %c5 = arith.constant 5 : index
    %208 = memref.load %arg1[%c5] : memref<46xf32, #tpu.memory_space<smem>>
    %c4_6 = arith.constant 4 : index
    %c0_7 = arith.constant 0 : index
    %209 = vector.load %arg0[%c4_6, %c0_7] : memref<24x256xf32, #tpu.memory_space<vmem>>, vector<4x256xf32>
    %c12_8 = arith.constant 12 : index
    %c0_9 = arith.constant 0 : index
    %210 = vector.load %arg0[%c12_8, %c0_9] : memref<24x256xf32, #tpu.memory_space<vmem>>, vector<4x256xf32>
    %c20_10 = arith.constant 20 : index
    %c0_11 = arith.constant 0 : index
    %211 = vector.load %arg0[%c20_10, %c0_11] : memref<24x256xf32, #tpu.memory_space<vmem>>, vector<4x256xf32>
    %212 = vector.broadcast %206 : f32 to vector<4x256xf32>
    %213 = arith.mulf %212, %210 : vector<4x256xf32>
    %214 = vector.broadcast %207 : f32 to vector<4x256xf32>
    %215 = arith.mulf %214, %211 : vector<4x256xf32>
    %216 = arith.addf %213, %215 : vector<4x256xf32>
    %c6_12 = arith.constant 6 : index
    %217 = memref.load %arg1[%c6_12] : memref<46xf32, #tpu.memory_space<smem>>
    %218 = vector.extract_strided_slice %209 {offsets = [0, 0], sizes = [1, 256], strides = [1, 1]} : vector<4x256xf32> to vector<1x256xf32>
    %219 = vector.broadcast %217 : f32 to vector<1x256xf32>
    %220 = arith.mulf %219, %218 : vector<1x256xf32>
    %c7_13 = arith.constant 7 : index
    %221 = memref.load %arg1[%c7_13] : memref<46xf32, #tpu.memory_space<smem>>
    %222 = vector.extract_strided_slice %209 {offsets = [1, 0], sizes = [1, 256], strides = [1, 1]} : vector<4x256xf32> to vector<1x256xf32>
    %223 = vector.broadcast %221 : f32 to vector<1x256xf32>
    %224 = arith.mulf %223, %222 : vector<1x256xf32>
    %225 = arith.addf %220, %224 : vector<1x256xf32>
    %c8_14 = arith.constant 8 : index
    %226 = memref.load %arg1[%c8_14] : memref<46xf32, #tpu.memory_space<smem>>
    %227 = vector.extract_strided_slice %209 {offsets = [2, 0], sizes = [1, 256], strides = [1, 1]} : vector<4x256xf32> to vector<1x256xf32>
    %228 = vector.broadcast %226 : f32 to vector<1x256xf32>
    %229 = arith.mulf %228, %227 : vector<1x256xf32>
    %230 = arith.addf %225, %229 : vector<1x256xf32>
    %c9_15 = arith.constant 9 : index
    %231 = memref.load %arg1[%c9_15] : memref<46xf32, #tpu.memory_space<smem>>
    %232 = vector.extract_strided_slice %209 {offsets = [3, 0], sizes = [1, 256], strides = [1, 1]} : vector<4x256xf32> to vector<1x256xf32>
    %233 = vector.broadcast %231 : f32 to vector<1x256xf32>
    %234 = arith.mulf %233, %232 : vector<1x256xf32>
    %235 = arith.addf %230, %234 : vector<1x256xf32>
    %c22_16 = arith.constant 22 : index
    %236 = memref.load %arg1[%c22_16] : memref<46xf32, #tpu.memory_space<smem>>
    %237 = vector.extract_strided_slice %216 {offsets = [0, 0], sizes = [1, 256], strides = [1, 1]} : vector<4x256xf32> to vector<1x256xf32>
    %238 = vector.broadcast %236 : f32 to vector<1x256xf32>
    %239 = arith.mulf %238, %237 : vector<1x256xf32>
    %240 = arith.addf %235, %239 : vector<1x256xf32>
    %c23_17 = arith.constant 23 : index
    %241 = memref.load %arg1[%c23_17] : memref<46xf32, #tpu.memory_space<smem>>
    %242 = vector.extract_strided_slice %216 {offsets = [1, 0], sizes = [1, 256], strides = [1, 1]} : vector<4x256xf32> to vector<1x256xf32>
    %243 = vector.broadcast %241 : f32 to vector<1x256xf32>
    %244 = arith.mulf %243, %242 : vector<1x256xf32>
    %245 = arith.addf %240, %244 : vector<1x256xf32>
    %c24_18 = arith.constant 24 : index
    %246 = memref.load %arg1[%c24_18] : memref<46xf32, #tpu.memory_space<smem>>
    %247 = vector.extract_strided_slice %216 {offsets = [2, 0], sizes = [1, 256], strides = [1, 1]} : vector<4x256xf32> to vector<1x256xf32>
    %248 = vector.broadcast %246 : f32 to vector<1x256xf32>
    %249 = arith.mulf %248, %247 : vector<1x256xf32>
    %250 = arith.addf %245, %249 : vector<1x256xf32>
    %c25_19 = arith.constant 25 : index
    %251 = memref.load %arg1[%c25_19] : memref<46xf32, #tpu.memory_space<smem>>
    %252 = vector.extract_strided_slice %216 {offsets = [3, 0], sizes = [1, 256], strides = [1, 1]} : vector<4x256xf32> to vector<1x256xf32>
    %253 = vector.broadcast %251 : f32 to vector<1x256xf32>
    %254 = arith.mulf %253, %252 : vector<1x256xf32>
    %255 = arith.addf %250, %254 : vector<1x256xf32>
    %c38_20 = arith.constant 38 : index
    %256 = memref.load %arg1[%c38_20] : memref<46xf32, #tpu.memory_space<smem>>
    %c42_21 = arith.constant 42 : index
    %257 = memref.load %arg1[%c42_21] : memref<46xf32, #tpu.memory_space<smem>>
    %258 = arith.mulf %257, %208 : f32
    %259 = arith.addf %256, %258 : f32
    %260 = vector.broadcast %259 : f32 to vector<1x256xf32>
    %261 = arith.addf %255, %260 : vector<1x256xf32>
    %262 = vector.extract_strided_slice %211 {offsets = [0, 0], sizes = [1, 256], strides = [1, 1]} : vector<4x256xf32> to vector<1x256xf32>
    %263 = arith.subf %262, %261 : vector<1x256xf32>
    %264 = math.absf %263 : vector<1x256xf32>
    %265 = arith.addf %205, %264 : vector<1x256xf32>
    %c10_22 = arith.constant 10 : index
    %266 = memref.load %arg1[%c10_22] : memref<46xf32, #tpu.memory_space<smem>>
    %267 = vector.extract_strided_slice %209 {offsets = [0, 0], sizes = [1, 256], strides = [1, 1]} : vector<4x256xf32> to vector<1x256xf32>
    %268 = vector.broadcast %266 : f32 to vector<1x256xf32>
    %269 = arith.mulf %268, %267 : vector<1x256xf32>
    %c11_23 = arith.constant 11 : index
    %270 = memref.load %arg1[%c11_23] : memref<46xf32, #tpu.memory_space<smem>>
    %271 = vector.extract_strided_slice %209 {offsets = [1, 0], sizes = [1, 256], strides = [1, 1]} : vector<4x256xf32> to vector<1x256xf32>
    %272 = vector.broadcast %270 : f32 to vector<1x256xf32>
    %273 = arith.mulf %272, %271 : vector<1x256xf32>
    %274 = arith.addf %269, %273 : vector<1x256xf32>
    %c12_24 = arith.constant 12 : index
    %275 = memref.load %arg1[%c12_24] : memref<46xf32, #tpu.memory_space<smem>>
    %276 = vector.extract_strided_slice %209 {offsets = [2, 0], sizes = [1, 256], strides = [1, 1]} : vector<4x256xf32> to vector<1x256xf32>
    %277 = vector.broadcast %275 : f32 to vector<1x256xf32>
    %278 = arith.mulf %277, %276 : vector<1x256xf32>
    %279 = arith.addf %274, %278 : vector<1x256xf32>
    %c13_25 = arith.constant 13 : index
    %280 = memref.load %arg1[%c13_25] : memref<46xf32, #tpu.memory_space<smem>>
    %281 = vector.extract_strided_slice %209 {offsets = [3, 0], sizes = [1, 256], strides = [1, 1]} : vector<4x256xf32> to vector<1x256xf32>
    %282 = vector.broadcast %280 : f32 to vector<1x256xf32>
    %283 = arith.mulf %282, %281 : vector<1x256xf32>
    %284 = arith.addf %279, %283 : vector<1x256xf32>
    %c26_26 = arith.constant 26 : index
    %285 = memref.load %arg1[%c26_26] : memref<46xf32, #tpu.memory_space<smem>>
    %286 = vector.extract_strided_slice %216 {offsets = [0, 0], sizes = [1, 256], strides = [1, 1]} : vector<4x256xf32> to vector<1x256xf32>
    %287 = vector.broadcast %285 : f32 to vector<1x256xf32>
    %288 = arith.mulf %287, %286 : vector<1x256xf32>
    %289 = arith.addf %284, %288 : vector<1x256xf32>
    %c27_27 = arith.constant 27 : index
    %290 = memref.load %arg1[%c27_27] : memref<46xf32, #tpu.memory_space<smem>>
    %291 = vector.extract_strided_slice %216 {offsets = [1, 0], sizes = [1, 256], strides = [1, 1]} : vector<4x256xf32> to vector<1x256xf32>
    %292 = vector.broadcast %290 : f32 to vector<1x256xf32>
    %293 = arith.mulf %292, %291 : vector<1x256xf32>
    %294 = arith.addf %289, %293 : vector<1x256xf32>
    %c28_28 = arith.constant 28 : index
    %295 = memref.load %arg1[%c28_28] : memref<46xf32, #tpu.memory_space<smem>>
    %296 = vector.extract_strided_slice %216 {offsets = [2, 0], sizes = [1, 256], strides = [1, 1]} : vector<4x256xf32> to vector<1x256xf32>
    %297 = vector.broadcast %295 : f32 to vector<1x256xf32>
    %298 = arith.mulf %297, %296 : vector<1x256xf32>
    %299 = arith.addf %294, %298 : vector<1x256xf32>
    %c29_29 = arith.constant 29 : index
    %300 = memref.load %arg1[%c29_29] : memref<46xf32, #tpu.memory_space<smem>>
    %301 = vector.extract_strided_slice %216 {offsets = [3, 0], sizes = [1, 256], strides = [1, 1]} : vector<4x256xf32> to vector<1x256xf32>
    %302 = vector.broadcast %300 : f32 to vector<1x256xf32>
    %303 = arith.mulf %302, %301 : vector<1x256xf32>
    %304 = arith.addf %299, %303 : vector<1x256xf32>
    %c39_30 = arith.constant 39 : index
    %305 = memref.load %arg1[%c39_30] : memref<46xf32, #tpu.memory_space<smem>>
    %c43_31 = arith.constant 43 : index
    %306 = memref.load %arg1[%c43_31] : memref<46xf32, #tpu.memory_space<smem>>
    %307 = arith.mulf %306, %208 : f32
    %308 = arith.addf %305, %307 : f32
    %309 = vector.broadcast %308 : f32 to vector<1x256xf32>
    %310 = arith.addf %304, %309 : vector<1x256xf32>
    %311 = vector.extract_strided_slice %211 {offsets = [1, 0], sizes = [1, 256], strides = [1, 1]} : vector<4x256xf32> to vector<1x256xf32>
    %312 = arith.subf %311, %310 : vector<1x256xf32>
    %313 = math.absf %312 : vector<1x256xf32>
    %314 = arith.addf %265, %313 : vector<1x256xf32>
    %c14_32 = arith.constant 14 : index
    %315 = memref.load %arg1[%c14_32] : memref<46xf32, #tpu.memory_space<smem>>
    %316 = vector.extract_strided_slice %209 {offsets = [0, 0], sizes = [1, 256], strides = [1, 1]} : vector<4x256xf32> to vector<1x256xf32>
    %317 = vector.broadcast %315 : f32 to vector<1x256xf32>
    %318 = arith.mulf %317, %316 : vector<1x256xf32>
    %c15_33 = arith.constant 15 : index
    %319 = memref.load %arg1[%c15_33] : memref<46xf32, #tpu.memory_space<smem>>
    %320 = vector.extract_strided_slice %209 {offsets = [1, 0], sizes = [1, 256], strides = [1, 1]} : vector<4x256xf32> to vector<1x256xf32>
    %321 = vector.broadcast %319 : f32 to vector<1x256xf32>
    %322 = arith.mulf %321, %320 : vector<1x256xf32>
    %323 = arith.addf %318, %322 : vector<1x256xf32>
    %c16_34 = arith.constant 16 : index
    %324 = memref.load %arg1[%c16_34] : memref<46xf32, #tpu.memory_space<smem>>
    %325 = vector.extract_strided_slice %209 {offsets = [2, 0], sizes = [1, 256], strides = [1, 1]} : vector<4x256xf32> to vector<1x256xf32>
    %326 = vector.broadcast %324 : f32 to vector<1x256xf32>
    %327 = arith.mulf %326, %325 : vector<1x256xf32>
    %328 = arith.addf %323, %327 : vector<1x256xf32>
    %c17_35 = arith.constant 17 : index
    %329 = memref.load %arg1[%c17_35] : memref<46xf32, #tpu.memory_space<smem>>
    %330 = vector.extract_strided_slice %209 {offsets = [3, 0], sizes = [1, 256], strides = [1, 1]} : vector<4x256xf32> to vector<1x256xf32>
    %331 = vector.broadcast %329 : f32 to vector<1x256xf32>
    %332 = arith.mulf %331, %330 : vector<1x256xf32>
    %333 = arith.addf %328, %332 : vector<1x256xf32>
    %c30_36 = arith.constant 30 : index
    %334 = memref.load %arg1[%c30_36] : memref<46xf32, #tpu.memory_space<smem>>
    %335 = vector.extract_strided_slice %216 {offsets = [0, 0], sizes = [1, 256], strides = [1, 1]} : vector<4x256xf32> to vector<1x256xf32>
    %336 = vector.broadcast %334 : f32 to vector<1x256xf32>
    %337 = arith.mulf %336, %335 : vector<1x256xf32>
    %338 = arith.addf %333, %337 : vector<1x256xf32>
    %c31_37 = arith.constant 31 : index
    %339 = memref.load %arg1[%c31_37] : memref<46xf32, #tpu.memory_space<smem>>
    %340 = vector.extract_strided_slice %216 {offsets = [1, 0], sizes = [1, 256], strides = [1, 1]} : vector<4x256xf32> to vector<1x256xf32>
    %341 = vector.broadcast %339 : f32 to vector<1x256xf32>
    %342 = arith.mulf %341, %340 : vector<1x256xf32>
    %343 = arith.addf %338, %342 : vector<1x256xf32>
    %c32_38 = arith.constant 32 : index
    %344 = memref.load %arg1[%c32_38] : memref<46xf32, #tpu.memory_space<smem>>
    %345 = vector.extract_strided_slice %216 {offsets = [2, 0], sizes = [1, 256], strides = [1, 1]} : vector<4x256xf32> to vector<1x256xf32>
    %346 = vector.broadcast %344 : f32 to vector<1x256xf32>
    %347 = arith.mulf %346, %345 : vector<1x256xf32>
    %348 = arith.addf %343, %347 : vector<1x256xf32>
    %c33_39 = arith.constant 33 : index
    %349 = memref.load %arg1[%c33_39] : memref<46xf32, #tpu.memory_space<smem>>
    %350 = vector.extract_strided_slice %216 {offsets = [3, 0], sizes = [1, 256], strides = [1, 1]} : vector<4x256xf32> to vector<1x256xf32>
    %351 = vector.broadcast %349 : f32 to vector<1x256xf32>
    %352 = arith.mulf %351, %350 : vector<1x256xf32>
    %353 = arith.addf %348, %352 : vector<1x256xf32>
    %c40_40 = arith.constant 40 : index
    %354 = memref.load %arg1[%c40_40] : memref<46xf32, #tpu.memory_space<smem>>
    %c44_41 = arith.constant 44 : index
    %355 = memref.load %arg1[%c44_41] : memref<46xf32, #tpu.memory_space<smem>>
    %356 = arith.mulf %355, %208 : f32
    %357 = arith.addf %354, %356 : f32
    %358 = vector.broadcast %357 : f32 to vector<1x256xf32>
    %359 = arith.addf %353, %358 : vector<1x256xf32>
    %360 = vector.extract_strided_slice %211 {offsets = [2, 0], sizes = [1, 256], strides = [1, 1]} : vector<4x256xf32> to vector<1x256xf32>
    %361 = arith.subf %360, %359 : vector<1x256xf32>
    %362 = math.absf %361 : vector<1x256xf32>
    %363 = arith.addf %314, %362 : vector<1x256xf32>
    %c18_42 = arith.constant 18 : index
    %364 = memref.load %arg1[%c18_42] : memref<46xf32, #tpu.memory_space<smem>>
    %365 = vector.extract_strided_slice %209 {offsets = [0, 0], sizes = [1, 256], strides = [1, 1]} : vector<4x256xf32> to vector<1x256xf32>
    %366 = vector.broadcast %364 : f32 to vector<1x256xf32>
    %367 = arith.mulf %366, %365 : vector<1x256xf32>
    %c19_43 = arith.constant 19 : index
    %368 = memref.load %arg1[%c19_43] : memref<46xf32, #tpu.memory_space<smem>>
    %369 = vector.extract_strided_slice %209 {offsets = [1, 0], sizes = [1, 256], strides = [1, 1]} : vector<4x256xf32> to vector<1x256xf32>
    %370 = vector.broadcast %368 : f32 to vector<1x256xf32>
    %371 = arith.mulf %370, %369 : vector<1x256xf32>
    %372 = arith.addf %367, %371 : vector<1x256xf32>
    %c20_44 = arith.constant 20 : index
    %373 = memref.load %arg1[%c20_44] : memref<46xf32, #tpu.memory_space<smem>>
    %374 = vector.extract_strided_slice %209 {offsets = [2, 0], sizes = [1, 256], strides = [1, 1]} : vector<4x256xf32> to vector<1x256xf32>
    %375 = vector.broadcast %373 : f32 to vector<1x256xf32>
    %376 = arith.mulf %375, %374 : vector<1x256xf32>
    %377 = arith.addf %372, %376 : vector<1x256xf32>
    %c21_45 = arith.constant 21 : index
    %378 = memref.load %arg1[%c21_45] : memref<46xf32, #tpu.memory_space<smem>>
    %379 = vector.extract_strided_slice %209 {offsets = [3, 0], sizes = [1, 256], strides = [1, 1]} : vector<4x256xf32> to vector<1x256xf32>
    %380 = vector.broadcast %378 : f32 to vector<1x256xf32>
    %381 = arith.mulf %380, %379 : vector<1x256xf32>
    %382 = arith.addf %377, %381 : vector<1x256xf32>
    %c34_46 = arith.constant 34 : index
    %383 = memref.load %arg1[%c34_46] : memref<46xf32, #tpu.memory_space<smem>>
    %384 = vector.extract_strided_slice %216 {offsets = [0, 0], sizes = [1, 256], strides = [1, 1]} : vector<4x256xf32> to vector<1x256xf32>
    %385 = vector.broadcast %383 : f32 to vector<1x256xf32>
    %386 = arith.mulf %385, %384 : vector<1x256xf32>
    %387 = arith.addf %382, %386 : vector<1x256xf32>
    %c35_47 = arith.constant 35 : index
    %388 = memref.load %arg1[%c35_47] : memref<46xf32, #tpu.memory_space<smem>>
    %389 = vector.extract_strided_slice %216 {offsets = [1, 0], sizes = [1, 256], strides = [1, 1]} : vector<4x256xf32> to vector<1x256xf32>
    %390 = vector.broadcast %388 : f32 to vector<1x256xf32>
    %391 = arith.mulf %390, %389 : vector<1x256xf32>
    %392 = arith.addf %387, %391 : vector<1x256xf32>
    %c36_48 = arith.constant 36 : index
    %393 = memref.load %arg1[%c36_48] : memref<46xf32, #tpu.memory_space<smem>>
    %394 = vector.extract_strided_slice %216 {offsets = [2, 0], sizes = [1, 256], strides = [1, 1]} : vector<4x256xf32> to vector<1x256xf32>
    %395 = vector.broadcast %393 : f32 to vector<1x256xf32>
    %396 = arith.mulf %395, %394 : vector<1x256xf32>
    %397 = arith.addf %392, %396 : vector<1x256xf32>
    %c37_49 = arith.constant 37 : index
    %398 = memref.load %arg1[%c37_49] : memref<46xf32, #tpu.memory_space<smem>>
    %399 = vector.extract_strided_slice %216 {offsets = [3, 0], sizes = [1, 256], strides = [1, 1]} : vector<4x256xf32> to vector<1x256xf32>
    %400 = vector.broadcast %398 : f32 to vector<1x256xf32>
    %401 = arith.mulf %400, %399 : vector<1x256xf32>
    %402 = arith.addf %397, %401 : vector<1x256xf32>
    %c41_50 = arith.constant 41 : index
    %403 = memref.load %arg1[%c41_50] : memref<46xf32, #tpu.memory_space<smem>>
    %c45_51 = arith.constant 45 : index
    %404 = memref.load %arg1[%c45_51] : memref<46xf32, #tpu.memory_space<smem>>
    %405 = arith.mulf %404, %208 : f32
    %406 = arith.addf %403, %405 : f32
    %407 = vector.broadcast %406 : f32 to vector<1x256xf32>
    %408 = arith.addf %402, %407 : vector<1x256xf32>
    %409 = vector.extract_strided_slice %211 {offsets = [3, 0], sizes = [1, 256], strides = [1, 1]} : vector<4x256xf32> to vector<1x256xf32>
    %410 = arith.subf %409, %408 : vector<1x256xf32>
    %411 = math.absf %410 : vector<1x256xf32>
    %412 = arith.addf %363, %411 : vector<1x256xf32>
    %413 = vector.shape_cast %412 : vector<1x256xf32> to vector<1x1x256xf32>
    %cst = arith.constant dense<0.000000e+00> : vector<1xf32>
    %414 = vector.multi_reduction <add>, %413, %cst [1, 2] : vector<1x1x256xf32> to vector<1xf32>
    %415 = vector.shape_cast %414 : vector<1xf32> to vector<1x1x1xf32>
    %416 = vector.extract %415[0, 0, 0] : f32 from vector<1x1x1xf32>
    %c0_52 = arith.constant 0 : index
    %c0_53 = arith.constant 0 : index
    %417 = memref.load %arg2[%c0_52, %c0_53] : memref<1x1xf32, #tpu.memory_space<smem>>
    memref.store %416, %arg2[%c0_52, %c0_53] : memref<1x1xf32, #tpu.memory_space<smem>>
    return
  }
}

</mosaic_0001>

<llo_original>
// kernel: gaussian_diffusion_p_losses.1
$region0: #{gaussian_diffusion_p_losses.1}
  #allocation0 [shape = 'u32[]', space=smem, size = 0x4, offset = 0x4, fixed_abs, tag = 'smem constant byte address 0x4 - core index']
  #allocation1 [shape = 'u32[72,128]{1,0:T(1,128)}', space=vmem, size = 0x9000, scoped, tag = 'internal scratch']
  %s0 = inlined_call_operand.vmem [shape: f32[24,256], index: 0, kind: input, shape index: {}]
  %s1 = inlined_call_operand.vmem [shape: f32[46], index: 1, kind: input, shape index: {}]
  %s2 = inlined_call_operand.hbm [shape: f32[1,1], index: 2, kind: output, shape index: {}]
  %s3 = sld [smem:[#allocation0]]
  $region22: #{gaussian_diffusion_p_losses.1} parent=0
    _
  %s5 = ssub.s32 1, %s3
  %s6 = scalar_select 0, %s5, %s3
  $region1: #{gaussian_diffusion_p_losses.1} parent=0
    #allocation2 [shape = 'u8[512]{0}', space=smem, size = 0x200, scoped, tag = 'input window, operand 1, single buffered']
    #allocation3 [shape = 's32[1]{0}', space=sflag, size = 0x4, scoped, tag = 'scoped memory for gaussian_diffusion_p_losses.1']
    #allocation4 [shape = 's32[1]{0}', space=sflag, size = 0x4, scoped, tag = 'scoped memory for gaussian_diffusion_p_losses.1']
    #allocation5 [shape = 'u8[512]{0}', space=smem, size = 0x200, scoped, tag = 'output window, operand 0, single buffered']
    %7 = vsyncpa [#allocation4], 0
    %8 = vsyncpa [#allocation3], 0
    // Predicated region
    $region2: #{gaussian_diffusion_p_losses.1} parent=1 // pred_check
      _
    $region3: #{gaussian_diffusion_p_losses.1} parent=1 // pred_check_branch
      %10 = sbr.rel (0) target = $region5
    $region4: #{gaussian_diffusion_p_losses.1} parent=1 // pred_region
      _
    $region5: #{gaussian_diffusion_p_losses.1} parent=1 // pred_fallthru
      _
    // Predicated region
    $region6: #{gaussian_diffusion_p_losses.1} parent=1 // pred_check
      _
    $region7: #{gaussian_diffusion_p_losses.1} parent=1 // pred_check_branch
      %12 = sbr.rel (0) target = $region9
    $region8: #{gaussian_diffusion_p_losses.1} parent=1 // pred_region
      %14 = vsyncadd [#allocation4], 0
      %s16 = sshll.u32 %s1, 4
      %s17 = int_to_ptr.vmem [resolvable:$true] %s16
      %19 = dma.vmem_to_smem %s17, 16, [#allocation2], [#allocation4]
    $region9: #{gaussian_diffusion_p_losses.1} parent=1 // pred_fallthru
      _
    // Predicated region
    $region10: #{gaussian_diffusion_p_losses.1} parent=1 // pred_check
      _
    $region11: #{gaussian_diffusion_p_losses.1} parent=1 // pred_check_branch
      %21 = sbr.rel (0) target = $region13
    $region12: #{gaussian_diffusion_p_losses.1} parent=1 // pred_region
      %23 = dma.done [#allocation4], 16
    $region13: #{gaussian_diffusion_p_losses.1} parent=1 // pred_fallthru
      _
    %24 = sfence
    %s25 = sld [smem:[#allocation2]]
    %s26 = sld [smem:[#allocation2 + $0x2]]
    %s27 = sld [smem:[#allocation2 + $0x4]]
    %v28 = vld [vmem:[%s0] sm:$0xf]
    %v29 = vld [vmem:[%s0 + $0x8] sm:$0xf]
    %v30 = vld [vmem:[%s0 + $0x10] sm:$0xf]
    %v31 = vld [vmem:[%s0 + $0x18] sm:$0xf]
    %v32 = vld [vmem:[%s0 + $0x20] sm:$0xf]
    %v33 = vld [vmem:[%s0 + $0x28] sm:$0xf]
    %v34 = vstv %s25
    %v35 = vmul.f32 %v34, %v30
    %v36 = vmul.f32 %v34, %v31
    %v37 = vstv %s26
    %v38 = vmul.f32 %v37, %v32
    %v39 = vmul.f32 %v37, %v33
    %v40 = vadd.f32 %v35, %v38
    %v41 = vadd.f32 %v36, %v39
    %s42 = sld [smem:[#allocation2 + $0x6]]
    %v43 = vstv %s42
    %v44 = vmul.f32 %v43, %v28
    %v45 = vmul.f32 %v43, %v29
    %s46 = sld [smem:[#allocation2 + $0x7]]
    %v47 = vstv %s46
    %v48 = vmul.f32 %v47, %v28
    %v49 = vmul.f32 %v47, %v29
    %v52 = vrot.slane %v48, 1
    %v53 = vrot.slane %v49, 1
    %v56 = vadd.f32 %v44, %v52
    %v57 = vadd.f32 %v45, %v53
    %s58 = sld [smem:[#allocation2 + $0x8]]
    %v59 = vstv %s58
    %v60 = vmul.f32 %v59, %v28
    %v61 = vmul.f32 %v59, %v29
    %v64 = vrot.slane %v60, 2
    %v65 = vrot.slane %v61, 2
    %v68 = vadd.f32 %v56, %v64
    %v69 = vadd.f32 %v57, %v65
    %s70 = sld [smem:[#allocation2 + $0x9]]
    %v71 = vstv %s70
    %v72 = vmul.f32 %v71, %v28
    %v73 = vmul.f32 %v71, %v29
    %v76 = vrot.slane %v72, 3
    %v77 = vrot.slane %v73, 3
    %v80 = vadd.f32 %v68, %v76
    %v81 = vadd.f32 %v69, %v77
    %s82 = sld [smem:[#allocation2 + $0x16]]
    %v83 = vstv %s82
    %v84 = vmul.f32 %v83, %v40
    %v85 = vmul.f32 %v83, %v41
    %v86 = vadd.f32 %v80, %v84
    %v87 = vadd.f32 %v81, %v85
    %s88 = sld [smem:[#allocation2 + $0x17]]
    %v89 = vstv %s88
    %v90 = vmul.f32 %v89, %v40
    %v91 = vmul.f32 %v89, %v41
    %v94 = vrot.slane %v90, 1
    %v95 = vrot.slane %v91, 1
    %v98 = vadd.f32 %v86, %v94
    %v99 = vadd.f32 %v87, %v95
    %s100 = sld [smem:[#allocation2 + $0x18]]
    %v101 = vstv %s100
    %v102 = vmul.f32 %v101, %v40
    %v103 = vmul.f32 %v101, %v41
    %v106 = vrot.slane %v102, 2
    %v107 = vrot.slane %v103, 2
    %v110 = vadd.f32 %v98, %v106
    %v111 = vadd.f32 %v99, %v107
    %s112 = sld [smem:[#allocation2 + $0x19]]
    %v113 = vstv %s112
    %v114 = vmul.f32 %v113, %v40
    %v115 = vmul.f32 %v113, %v41
    %v118 = vrot.slane %v114, 3
    %v119 = vrot.slane %v115, 3
    %v122 = vadd.f32 %v110, %v118
    %v123 = vadd.f32 %v111, %v119
    %s124 = sld [smem:[#allocation2 + $0x26]]
    %s125 = sld [smem:[#allocation2 + $0x2a]]
    %s126 = smul.f32 %s125, %s27
    %s127 = sadd.f32 %s124, %s126
    %v128 = vstv %s127
    %v129 = vadd.f32 %v122, %v128
    %v130 = vadd.f32 %v123, %v128
    %v131 = vsub.f32 %v32, %v129
    %v132 = vsub.f32 %v33, %v130
    %v133 = vand.u32 2147483647, %v131
    %v134 = vand.u32 2147483647, %v132
    %s135 = sld [smem:[#allocation2 + $0xa]]
    %v136 = vstv %s135
    %v137 = vmul.f32 %v136, %v28
    %v138 = vmul.f32 %v136, %v29
    %s139 = sld [smem:[#allocation2 + $0xb]]
    %v140 = vstv %s139
    %v141 = vmul.f32 %v140, %v28
    %v142 = vmul.f32 %v140, %v29
    %v145 = vrot.slane %v141, 1
    %v146 = vrot.slane %v142, 1
    %v149 = vadd.f32 %v137, %v145
    %v150 = vadd.f32 %v138, %v146
    %s151 = sld [smem:[#allocation2 + $0xc]]
    %v152 = vstv %s151
    %v153 = vmul.f32 %v152, %v28
    %v154 = vmul.f32 %v152, %v29
    %v157 = vrot.slane %v153, 2
    %v158 = vrot.slane %v154, 2
    %v161 = vadd.f32 %v149, %v157
    %v162 = vadd.f32 %v150, %v158
    %s163 = sld [smem:[#allocation2 + $0xd]]
    %v164 = vstv %s163
    %v165 = vmul.f32 %v164, %v28
    %v166 = vmul.f32 %v164, %v29
    %v169 = vrot.slane %v165, 3
    %v170 = vrot.slane %v166, 3
    %v173 = vadd.f32 %v161, %v169
    %v174 = vadd.f32 %v162, %v170
    %s175 = sld [smem:[#allocation2 + $0x1a]]
    %v176 = vstv %s175
    %v177 = vmul.f32 %v176, %v40
    %v178 = vmul.f32 %v176, %v41
    %v179 = vadd.f32 %v173, %v177
    %v180 = vadd.f32 %v174, %v178
    %s181 = sld [smem:[#allocation2 + $0x1b]]
    %v182 = vstv %s181
    %v183 = vmul.f32 %v182, %v40
    %v184 = vmul.f32 %v182, %v41
    %v187 = vrot.slane %v183, 1
    %v188 = vrot.slane %v184, 1
    %v191 = vadd.f32 %v179, %v187
    %v192 = vadd.f32 %v180, %v188
    %s193 = sld [smem:[#allocation2 + $0x1c]]
    %v194 = vstv %s193
    %v195 = vmul.f32 %v194, %v40
    %v196 = vmul.f32 %v194, %v41
    %v199 = vrot.slane %v195, 2
    %v200 = vrot.slane %v196, 2
    %v203 = vadd.f32 %v191, %v199
    %v204 = vadd.f32 %v192, %v200
    %s205 = sld [smem:[#allocation2 + $0x1d]]
    %v206 = vstv %s205
    %v207 = vmul.f32 %v206, %v40
    %v208 = vmul.f32 %v206, %v41
    %v211 = vrot.slane %v207, 3
    %v212 = vrot.slane %v208, 3
    %v215 = vadd.f32 %v203, %v211
    %v216 = vadd.f32 %v204, %v212
    %s217 = sld [smem:[#allocation2 + $0x27]]
    %s218 = sld [smem:[#allocation2 + $0x2b]]
    %s219 = smul.f32 %s218, %s27
    %s220 = sadd.f32 %s217, %s219
    %v221 = vstv %s220
    %v222 = vadd.f32 %v215, %v221
    %v223 = vadd.f32 %v216, %v221
    %v226 = vrot.slane %v222, 7
    %v227 = vrot.slane %v223, 7
    %v230 = vsub.f32 %v32, %v226
    %v231 = vsub.f32 %v33, %v227
    %v232 = vand.u32 2147483647, %v230
    %v233 = vand.u32 2147483647, %v231
    %v236 = vrot.slane %v232, 1
    %v237 = vrot.slane %v233, 1
    %v240 = vadd.f32 %v133, %v236
    %v241 = vadd.f32 %v134, %v237
    %s242 = sld [smem:[#allocation2 + $0xe]]
    %v243 = vstv %s242
    %v244 = vmul.f32 %v243, %v28
    %v245 = vmul.f32 %v243, %v29
    %s246 = sld [smem:[#allocation2 + $0xf]]
    %v247 = vstv %s246
    %v248 = vmul.f32 %v247, %v28
    %v249 = vmul.f32 %v247, %v29
    %v252 = vrot.slane %v248, 1
    %v253 = vrot.slane %v249, 1
    %v256 = vadd.f32 %v244, %v252
    %v257 = vadd.f32 %v245, %v253
    %s258 = sld [smem:[#allocation2 + $0x10]]
    %v259 = vstv %s258
    %v260 = vmul.f32 %v259, %v28
    %v261 = vmul.f32 %v259, %v29
    %v264 = vrot.slane %v260, 2
    %v265 = vrot.slane %v261, 2
    %v268 = vadd.f32 %v256, %v264
    %v269 = vadd.f32 %v257, %v265
    %s270 = sld [smem:[#allocation2 + $0x11]]
    %v271 = vstv %s270
    %v272 = vmul.f32 %v271, %v28
    %v273 = vmul.f32 %v271, %v29
    %v276 = vrot.slane %v272, 3
    %v277 = vrot.slane %v273, 3
    %v280 = vadd.f32 %v268, %v276
    %v281 = vadd.f32 %v269, %v277
    %s282 = sld [smem:[#allocation2 + $0x1e]]
    %v283 = vstv %s282
    %v284 = vmul.f32 %v283, %v40
    %v285 = vmul.f32 %v283, %v41
    %v286 = vadd.f32 %v280, %v284
    %v287 = vadd.f32 %v281, %v285
    %s288 = sld [smem:[#allocation2 + $0x1f]]
    %v289 = vstv %s288
    %v290 = vmul.f32 %v289, %v40
    %v291 = vmul.f32 %v289, %v41
    %v294 = vrot.slane %v290, 1
    %v295 = vrot.slane %v291, 1
    %v298 = vadd.f32 %v286, %v294
    %v299 = vadd.f32 %v287, %v295
    %s300 = sld [smem:[#allocation2 + $0x20]]
    %v301 = vstv %s300
    %v302 = vmul.f32 %v301, %v40
    %v303 = vmul.f32 %v301, %v41
    %v306 = vrot.slane %v302, 2
    %v307 = vrot.slane %v303, 2
    %v310 = vadd.f32 %v298, %v306
    %v311 = vadd.f32 %v299, %v307
    %s312 = sld [smem:[#allocation2 + $0x21]]
    %v313 = vstv %s312
    %v314 = vmul.f32 %v313, %v40
    %v315 = vmul.f32 %v313, %v41
    %v318 = vrot.slane %v314, 3
    %v319 = vrot.slane %v315, 3
    %v322 = vadd.f32 %v310, %v318
    %v323 = vadd.f32 %v311, %v319
    %s324 = sld [smem:[#allocation2 + $0x28]]
    %s325 = sld [smem:[#allocation2 + $0x2c]]
    %s326 = smul.f32 %s325, %s27
    %s327 = sadd.f32 %s324, %s326
    %v328 = vstv %s327
    %v329 = vadd.f32 %v322, %v328
    %v330 = vadd.f32 %v323, %v328
    %v333 = vrot.slane %v329, 6
    %v334 = vrot.slane %v330, 6
    %v337 = vsub.f32 %v32, %v333
    %v338 = vsub.f32 %v33, %v334
    %v339 = vand.u32 2147483647, %v337
    %v340 = vand.u32 2147483647, %v338
    %v343 = vrot.slane %v339, 2
    %v344 = vrot.slane %v340, 2
    %v347 = vadd.f32 %v240, %v343
    %v348 = vadd.f32 %v241, %v344
    %s349 = sld [smem:[#allocation2 + $0x12]]
    %v350 = vstv %s349
    %v351 = vmul.f32 %v350, %v28
    %v352 = vmul.f32 %v350, %v29
    %s353 = sld [smem:[#allocation2 + $0x13]]
    %v354 = vstv %s353
    %v355 = vmul.f32 %v354, %v28
    %v356 = vmul.f32 %v354, %v29
    %v359 = vrot.slane %v355, 1
    %v360 = vrot.slane %v356, 1
    %v363 = vadd.f32 %v351, %v359
    %v364 = vadd.f32 %v352, %v360
    %s365 = sld [smem:[#allocation2 + $0x14]]
    %v366 = vstv %s365
    %v367 = vmul.f32 %v366, %v28
    %v368 = vmul.f32 %v366, %v29
    %v371 = vrot.slane %v367, 2
    %v372 = vrot.slane %v368, 2
    %v375 = vadd.f32 %v363, %v371
    %v376 = vadd.f32 %v364, %v372
    %s377 = sld [smem:[#allocation2 + $0x15]]
    %v378 = vstv %s377
    %v379 = vmul.f32 %v378, %v28
    %v380 = vmul.f32 %v378, %v29
    %v383 = vrot.slane %v379, 3
    %v384 = vrot.slane %v380, 3
    %v387 = vadd.f32 %v375, %v383
    %v388 = vadd.f32 %v376, %v384
    %s389 = sld [smem:[#allocation2 + $0x22]]
    %v390 = vstv %s389
    %v391 = vmul.f32 %v390, %v40
    %v392 = vmul.f32 %v390, %v41
    %v393 = vadd.f32 %v387, %v391
    %v394 = vadd.f32 %v388, %v392
    %s395 = sld [smem:[#allocation2 + $0x23]]
    %v396 = vstv %s395
    %v397 = vmul.f32 %v396, %v40
    %v398 = vmul.f32 %v396, %v41
    %v401 = vrot.slane %v397, 1
    %v402 = vrot.slane %v398, 1
    %v405 = vadd.f32 %v393, %v401
    %v406 = vadd.f32 %v394, %v402
    %s407 = sld [smem:[#allocation2 + $0x24]]
    %v408 = vstv %s407
    %v409 = vmul.f32 %v408, %v40
    %v410 = vmul.f32 %v408, %v41
    %v413 = vrot.slane %v409, 2
    %v414 = vrot.slane %v410, 2
    %v417 = vadd.f32 %v405, %v413
    %v418 = vadd.f32 %v406, %v414
    %s419 = sld [smem:[#allocation2 + $0x25]]
    %v420 = vstv %s419
    %v421 = vmul.f32 %v420, %v40
    %v422 = vmul.f32 %v420, %v41
    %v425 = vrot.slane %v421, 3
    %v426 = vrot.slane %v422, 3
    %v429 = vadd.f32 %v417, %v425
    %v430 = vadd.f32 %v418, %v426
    %s431 = sld [smem:[#allocation2 + $0x29]]
    %s432 = sld [smem:[#allocation2 + $0x2d]]
    %s433 = smul.f32 %s432, %s27
    %s434 = sadd.f32 %s431, %s433
    %v435 = vstv %s434
    %v436 = vadd.f32 %v429, %v435
    %v437 = vadd.f32 %v430, %v435
    %v440 = vrot.slane %v436, 5
    %v441 = vrot.slane %v437, 5
    %v444 = vsub.f32 %v32, %v440
    %v445 = vsub.f32 %v33, %v441
    %v446 = vand.u32 2147483647, %v444
    %v447 = vand.u32 2147483647, %v445
    %v450 = vrot.slane %v446, 3
    %v451 = vrot.slane %v447, 3
    %v454 = vadd.f32 %v347, %v450
    %v455 = vadd.f32 %v348, %v451
    %s456 = sld [smem:[#allocation2 + $0x1]]
    %s457 = sld [smem:[#allocation2 + $0x3]]
    %s458 = sld [smem:[#allocation2 + $0x5]]
    %v459 = vld [vmem:[%s0] sm:$0xf0]
    %v460 = vld [vmem:[%s0 + $0x8] sm:$0xf0]
    %v461 = vld [vmem:[%s0 + $0x10] sm:$0xf0]
    %v462 = vld [vmem:[%s0 + $0x18] sm:$0xf0]
    %v463 = vld [vmem:[%s0 + $0x20] sm:$0xf0]
    %v464 = vld [vmem:[%s0 + $0x28] sm:$0xf0]
    %v465 = vstv %s456
    %v466 = vmul.f32 %v465, %v461
    %v467 = vmul.f32 %v465, %v462
    %v468 = vstv %s457
    %v469 = vmul.f32 %v468, %v463
    %v470 = vmul.f32 %v468, %v464
    %v471 = vadd.f32 %v466, %v469
    %v472 = vadd.f32 %v467, %v470
    %v473 = vmul.f32 %v43, %v459
    %v474 = vmul.f32 %v43, %v460
    %v475 = vmul.f32 %v47, %v459
    %v476 = vmul.f32 %v47, %v460
    %v479 = vrot.slane %v475, 1
    %v480 = vrot.slane %v476, 1
    %v483 = vadd.f32 %v473, %v479
    %v484 = vadd.f32 %v474, %v480
    %v485 = vmul.f32 %v59, %v459
    %v486 = vmul.f32 %v59, %v460
    %v489 = vrot.slane %v485, 2
    %v490 = vrot.slane %v486, 2
    %v493 = vadd.f32 %v483, %v489
    %v494 = vadd.f32 %v484, %v490
    %v495 = vmul.f32 %v71, %v459
    %v496 = vmul.f32 %v71, %v460
    %v499 = vrot.slane %v495, 3
    %v500 = vrot.slane %v496, 3
    %v503 = vadd.f32 %v493, %v499
    %v504 = vadd.f32 %v494, %v500
    %v505 = vmul.f32 %v83, %v471
    %v506 = vmul.f32 %v83, %v472
    %v507 = vadd.f32 %v503, %v505
    %v508 = vadd.f32 %v504, %v506
    %v509 = vmul.f32 %v89, %v471
    %v510 = vmul.f32 %v89, %v472
    %v513 = vrot.slane %v509, 1
    %v514 = vrot.slane %v510, 1
    %v517 = vadd.f32 %v507, %v513
    %v518 = vadd.f32 %v508, %v514
    %v519 = vmul.f32 %v101, %v471
    %v520 = vmul.f32 %v101, %v472
    %v523 = vrot.slane %v519, 2
    %v524 = vrot.slane %v520, 2
    %v527 = vadd.f32 %v517, %v523
    %v528 = vadd.f32 %v518, %v524
    %v529 = vmul.f32 %v113, %v471
    %v530 = vmul.f32 %v113, %v472
    %v533 = vrot.slane %v529, 3
    %v534 = vrot.slane %v530, 3
    %v537 = vadd.f32 %v527, %v533
    %v538 = vadd.f32 %v528, %v534
    %s539 = smul.f32 %s125, %s458
    %s540 = sadd.f32 %s124, %s539
    %v541 = vstv %s540
    %v542 = vadd.f32 %v537, %v541
    %v543 = vadd.f32 %v538, %v541
    %v544 = vsub.f32 %v463, %v542
    %v545 = vsub.f32 %v464, %v543
    %v546 = vand.u32 2147483647, %v544
    %v547 = vand.u32 2147483647, %v545
    %v550 = vrot.slane %v546, 4
    %v551 = vrot.slane %v547, 4
    %v554 = vadd.f32 %v454, %v550
    %v555 = vadd.f32 %v455, %v551
    %v556 = vmul.f32 %v136, %v459
    %v557 = vmul.f32 %v136, %v460
    %v558 = vmul.f32 %v140, %v459
    %v559 = vmul.f32 %v140, %v460
    %v562 = vrot.slane %v558, 1
    %v563 = vrot.slane %v559, 1
    %v566 = vadd.f32 %v556, %v562
    %v567 = vadd.f32 %v557, %v563
    %v568 = vmul.f32 %v152, %v459
    %v569 = vmul.f32 %v152, %v460
    %v572 = vrot.slane %v568, 2
    %v573 = vrot.slane %v569, 2
    %v576 = vadd.f32 %v566, %v572
    %v577 = vadd.f32 %v567, %v573
    %v578 = vmul.f32 %v164, %v459
    %v579 = vmul.f32 %v164, %v460
    %v582 = vrot.slane %v578, 3
    %v583 = vrot.slane %v579, 3
    %v586 = vadd.f32 %v576, %v582
    %v587 = vadd.f32 %v577, %v583
    %v588 = vmul.f32 %v176, %v471
    %v589 = vmul.f32 %v176, %v472
    %v590 = vadd.f32 %v586, %v588
    %v591 = vadd.f32 %v587, %v589
    %v592 = vmul.f32 %v182, %v471
    %v593 = vmul.f32 %v182, %v472
    %v596 = vrot.slane %v592, 1
    %v597 = vrot.slane %v593, 1
    %v600 = vadd.f32 %v590, %v596
    %v601 = vadd.f32 %v591, %v597
    %v602 = vmul.f32 %v194, %v471
    %v603 = vmul.f32 %v194, %v472
    %v606 = vrot.slane %v602, 2
    %v607 = vrot.slane %v603, 2
    %v610 = vadd.f32 %v600, %v606
    %v611 = vadd.f32 %v601, %v607
    %v612 = vmul.f32 %v206, %v471
    %v613 = vmul.f32 %v206, %v472
    %v616 = vrot.slane %v612, 3
    %v617 = vrot.slane %v613, 3
    %v620 = vadd.f32 %v610, %v616
    %v621 = vadd.f32 %v611, %v617
    %s622 = smul.f32 %s218, %s458
    %s623 = sadd.f32 %s217, %s622
    %v624 = vstv %s623
    %v625 = vadd.f32 %v620, %v624
    %v626 = vadd.f32 %v621, %v624
    %v629 = vrot.slane %v625, 7
    %v630 = vrot.slane %v626, 7
    %v633 = vsub.f32 %v463, %v629
    %v634 = vsub.f32 %v464, %v630
    %v635 = vand.u32 2147483647, %v633
    %v636 = vand.u32 2147483647, %v634
    %v639 = vrot.slane %v635, 5
    %v640 = vrot.slane %v636, 5
    %v643 = vadd.f32 %v554, %v639
    %v644 = vadd.f32 %v555, %v640
    %v645 = vmul.f32 %v243, %v459
    %v646 = vmul.f32 %v243, %v460
    %v647 = vmul.f32 %v247, %v459
    %v648 = vmul.f32 %v247, %v460
    %v651 = vrot.slane %v647, 1
    %v652 = vrot.slane %v648, 1
    %v655 = vadd.f32 %v645, %v651
    %v656 = vadd.f32 %v646, %v652
    %v657 = vmul.f32 %v259, %v459
    %v658 = vmul.f32 %v259, %v460
    %v661 = vrot.slane %v657, 2
    %v662 = vrot.slane %v658, 2
    %v665 = vadd.f32 %v655, %v661
    %v666 = vadd.f32 %v656, %v662
    %v667 = vmul.f32 %v271, %v459
    %v668 = vmul.f32 %v271, %v460
    %v671 = vrot.slane %v667, 3
    %v672 = vrot.slane %v668, 3
    %v675 = vadd.f32 %v665, %v671
    %v676 = vadd.f32 %v666, %v672
    %v677 = vmul.f32 %v283, %v471
    %v678 = vmul.f32 %v283, %v472
    %v679 = vadd.f32 %v675, %v677
    %v680 = vadd.f32 %v676, %v678
    %v681 = vmul.f32 %v289, %v471
    %v682 = vmul.f32 %v289, %v472
    %v685 = vrot.slane %v681, 1
    %v686 = vrot.slane %v682, 1
    %v689 = vadd.f32 %v679, %v685
    %v690 = vadd.f32 %v680, %v686
    %v691 = vmul.f32 %v301, %v471
    %v692 = vmul.f32 %v301, %v472
    %v695 = vrot.slane %v691, 2
    %v696 = vrot.slane %v692, 2
    %v699 = vadd.f32 %v689, %v695
    %v700 = vadd.f32 %v690, %v696
    %v701 = vmul.f32 %v313, %v471
    %v702 = vmul.f32 %v313, %v472
    %v705 = vrot.slane %v701, 3
    %v706 = vrot.slane %v702, 3
    %v709 = vadd.f32 %v699, %v705
    %v710 = vadd.f32 %v700, %v706
    %s711 = smul.f32 %s325, %s458
    %s712 = sadd.f32 %s324, %s711
    %v713 = vstv %s712
    %v714 = vadd.f32 %v709, %v713
    %v715 = vadd.f32 %v710, %v713
    %v718 = vrot.slane %v714, 6
    %v719 = vrot.slane %v715, 6
    %v722 = vsub.f32 %v463, %v718
    %v723 = vsub.f32 %v464, %v719
    %v724 = vand.u32 2147483647, %v722
    %v725 = vand.u32 2147483647, %v723
    %v728 = vrot.slane %v724, 6
    %v729 = vrot.slane %v725, 6
    %v732 = vadd.f32 %v643, %v728
    %v733 = vadd.f32 %v644, %v729
    %v734 = vmul.f32 %v350, %v459
    %v735 = vmul.f32 %v350, %v460
    %v736 = vmul.f32 %v354, %v459
    %v737 = vmul.f32 %v354, %v460
    %v740 = vrot.slane %v736, 1
    %v741 = vrot.slane %v737, 1
    %v744 = vadd.f32 %v734, %v740
    %v745 = vadd.f32 %v735, %v741
    %v746 = vmul.f32 %v366, %v459
    %v747 = vmul.f32 %v366, %v460
    %v750 = vrot.slane %v746, 2
    %v751 = vrot.slane %v747, 2
    %v754 = vadd.f32 %v744, %v750
    %v755 = vadd.f32 %v745, %v751
    %v756 = vmul.f32 %v378, %v459
    %v757 = vmul.f32 %v378, %v460
    %v760 = vrot.slane %v756, 3
    %v761 = vrot.slane %v757, 3
    %v764 = vadd.f32 %v754, %v760
    %v765 = vadd.f32 %v755, %v761
    %v766 = vmul.f32 %v390, %v471
    %v767 = vmul.f32 %v390, %v472
    %v768 = vadd.f32 %v764, %v766
    %v769 = vadd.f32 %v765, %v767
    %v770 = vmul.f32 %v396, %v471
    %v771 = vmul.f32 %v396, %v472
    %v774 = vrot.slane %v770, 1
    %v775 = vrot.slane %v771, 1
    %v778 = vadd.f32 %v768, %v774
    %v779 = vadd.f32 %v769, %v775
    %v780 = vmul.f32 %v408, %v471
    %v781 = vmul.f32 %v408, %v472
    %v784 = vrot.slane %v780, 2
    %v785 = vrot.slane %v781, 2
    %v788 = vadd.f32 %v778, %v784
    %v789 = vadd.f32 %v779, %v785
    %v790 = vmul.f32 %v420, %v471
    %v791 = vmul.f32 %v420, %v472
    %v794 = vrot.slane %v790, 3
    %v795 = vrot.slane %v791, 3
    %v798 = vadd.f32 %v788, %v794
    %v799 = vadd.f32 %v789, %v795
    %s800 = smul.f32 %s432, %s458
    %s801 = sadd.f32 %s431, %s800
    %v802 = vstv %s801
    %v803 = vadd.f32 %v798, %v802
    %v804 = vadd.f32 %v799, %v802
    %v807 = vrot.slane %v803, 5
    %v808 = vrot.slane %v804, 5
    %v811 = vsub.f32 %v463, %v807
    %v812 = vsub.f32 %v464, %v808
    %v813 = vand.u32 2147483647, %v811
    %v814 = vand.u32 2147483647, %v812
    %v817 = vrot.slane %v813, 7
    %v818 = vrot.slane %v814, 7
    %v821 = vadd.f32 %v732, %v817
    %v822 = vadd.f32 %v733, %v818
    %vm823 = vcmask 1040384
    %v824 = vsel %vm823, %v821, 0.0
    %v825 = vsel %vm823, %v822, 0.0
    %v826 = vadd.f32 %v824, %v825
    %827 = vadd.xlane.f32.xlu0 %v826
    %v828 = vpop.xlane.xlu0 %827
    %v829 = vrot.slane %v828, 4
    %v830 = vadd.f32 %v828, %v829
    %v831 = vrot.slane %v830, 2
    %v832 = vadd.f32 %v830, %v831
    %v833 = vrot.slane %v832, 1
    %v834 = vadd.f32 %v832, %v833
    %s835 = vtos %v834
    %s836 = scalar_lea.smem [#allocation5], 0
    %837 = sst [smem:[%s836]] %s835
    // Predicated region
    $region14: #{gaussian_diffusion_p_losses.1} parent=1 // pred_check
      _
    $region15: #{gaussian_diffusion_p_losses.1} parent=1 // pred_check_branch
      %839 = sbr.rel (0) target = $region17
    $region16: #{gaussian_diffusion_p_losses.1} parent=1 // pred_region
      %841 = vsyncadd [#allocation3], 0
      %s843 = sshll.u32 %s2, 4
      %s844 = int_to_ptr.hbm [resolvable:$true] %s843
      %846 = dma.smem_to_hbm [#allocation5], 16, %s844, [#allocation3]
    $region17: #{gaussian_diffusion_p_losses.1} parent=1 // pred_fallthru
      _
    // Predicated region
    $region18: #{gaussian_diffusion_p_losses.1} parent=1 // pred_check
      _
    $region19: #{gaussian_diffusion_p_losses.1} parent=1 // pred_check_branch
      %848 = sbr.rel (0) target = $region21
    $region20: #{gaussian_diffusion_p_losses.1} parent=1 // pred_region
      %850 = dma.done [#allocation3], 16
    $region21: #{gaussian_diffusion_p_losses.1} parent=1 // pred_fallthru
      _
    %851 = sfence
    %852 = vsyncpa [#allocation3], 1
    %853 = vsyncpa [#allocation4], 1

</llo_original>
